<compile_context>
chip_gen: v5e
topology: v5e:2x2
jax: 0.10.0
libtpu: 0.0.40
codegen_flags: <defaults>
</compile_context>

<pallas_src>
import jax
import jax.numpy as jnp
from jax.experimental import pallas as pl
from jax.experimental.pallas import tpu as pltpu


def encoder_kernel(lbl_ref, h_ref, wh_ref, w0_ref, b_ref, o_ref):
    # lbl_ref: [TN, 1]        bfs_label column
    # h_ref:   [TN, H]        h_bfs row tile
    # wh_ref:  [H, OP]        W.T rows 1..in_dim-1 (resident across grid)
    # w0_ref:  [1, OP]        W.T row 0 (label column of the weight)
    # b_ref:   [1, OP]        bias (padded)
    # o_ref:   [TN, OP]       lane-dense (OP multiple of 128) output tile
    y = jnp.dot(h_ref[...], wh_ref[...], preferred_element_type=jnp.float32)
    y = y + lbl_ref[...] * w0_ref[...]      # fused concat: label-column contribution
    y = y + b_ref[...]                      # broadcast bias over rows
    o_ref[...] = jnp.maximum(y, 0.0).astype(o_ref.dtype)


def prepare_encoder_params(weight, bias):
    """One-time parameter prep (do NOT call per forward).

    weight: [out_dim, in_dim] (PyTorch nn.Linear layout), bias: [out_dim].
    Returns (wh, w0, b2, out_dim) with the weight pre-transposed, split into the
    label row / h_bfs rows, and padded to a lane-dense (multiple-of-128) width.
    """
    out_dim, in_dim = weight.shape
    out_pad = ((out_dim + 127) // 128) * 128
    wt = jnp.pad(weight.T, ((0, 0), (0, out_pad - out_dim)))   # [in_dim, out_pad]
    w0 = wt[0:1, :]                                            # [1, out_pad]
    wh = wt[1:, :]                                             # [in_dim-1, out_pad]
    b2 = jnp.pad(bias, (0, out_pad - out_dim))[None, :]        # [1, out_pad]
    return wh, w0, b2, out_dim


def encoder_forward(bfs_label, h_bfs, wh, w0, b2, out_dim, *, max_rows_per_tile=512):
    """bfs_label: [N] f32, h_bfs: [N, H] f32; (wh, w0, b2, out_dim) from
    prepare_encoder_params. Returns relu(cat([bfs_label[:,None], h_bfs],1) @ W.T + b)."""
    n, hdim = h_bfs.shape
    out_pad = wh.shape[1]
    lbl = bfs_label[:, None]                                   # [N, 1] (cheap reshape)

    # Row tile: full N when small, else a multiple-of-8 tile large enough to hit
    # the HBM roofline while staying far under VMEM budget (even on v7x 64 MiB).
    tn = n if n <= max_rows_per_tile else max_rows_per_tile
    grid = (pl.cdiv(n, tn),)
    # NOTE: a partial last row tile is safe — only the row axis can go OOB, and
    # Pallas masks OOB output rows on write-back.

    out = pl.pallas_call(
        encoder_kernel,
        out_shape=jax.ShapeDtypeStruct((n, out_pad), h_bfs.dtype),
        grid_spec=pltpu.PrefetchScalarGridSpec(
            num_scalar_prefetch=0,
            grid=grid,
            in_specs=[
                pl.BlockSpec((tn, 1), lambda i: (i, 0)),          # bfs_label column tile
                pl.BlockSpec((tn, hdim), lambda i: (i, 0)),       # h_bfs row tile
                pl.BlockSpec((hdim, out_pad), lambda i: (0, 0)),  # W.T[1:] (resident)
                pl.BlockSpec((1, out_pad), lambda i: (0, 0)),     # W.T[0:1] (resident)
                pl.BlockSpec((1, out_pad), lambda i: (0, 0)),     # bias (resident)
            ],
            out_specs=pl.BlockSpec((tn, out_pad), lambda i: (i, 0)),
        ),
        compiler_params=pltpu.CompilerParams(
            dimension_semantics=("parallel",)),   # row tiles independent (2 TCs on v7x)
    )(lbl, h_bfs, wh, w0, b2)

    return out[:, :out_dim]


if __name__ == "__main__":
    # Small shapes implied by the forward: N nodes, H-dim BFS hidden state.
    N = 8
    H = 31
    IN_DIM = 1 + H          # bfs_label (1) concatenated with h_bfs (H)
    OUT_DIM = 32

    key = jax.random.PRNGKey(0)
    k1, k2, k3, k4 = jax.random.split(key, 4)

    # Deterministic "parameters" (mimic nn.Linear uniform(-1/sqrt(in), 1/sqrt(in)))
    bound = 1.0 / jnp.sqrt(jnp.float32(IN_DIM))
    weight = jax.random.uniform(k1, (OUT_DIM, IN_DIM), jnp.float32, -bound, bound)
    bias = jax.random.uniform(k2, (OUT_DIM,), jnp.float32, -bound, bound)

    # Deterministic inputs
    bfs_label = jax.random.normal(k3, (N,), jnp.float32)
    h_bfs = jax.random.normal(k4, (N, H), jnp.float32)

    # One-time parameter prep (transpose + pad), outside the per-call hot path.
    wh, w0, b2, out_dim = prepare_encoder_params(weight, bias)
    wh, w0, b2 = jax.block_until_ready((wh, w0, b2))

    out = encoder_forward(bfs_label, h_bfs, wh, w0, b2, out_dim)
    out = jax.block_until_ready(out)

    # Cross-check against a pure-JAX reference of the same math.
    x_ref = jnp.concatenate([bfs_label[:, None], h_bfs], axis=1)
    ref = jnp.maximum(x_ref @ weight.T + bias, 0.0)
    assert out.shape == (N, OUT_DIM)
    assert jnp.allclose(out, ref, atol=1e-5, rtol=1e-5)

    print("KERNEL_OK")
</pallas_src>

<mosaic_0001>
module attributes {stable_mosaic.version = 11 : i64} {
  func.func @encoder_kernel(%arg0: i32, %arg1: memref<8x1xf32, #tpu.memory_space<vmem>>, %arg2: memref<8x31xf32, #tpu.memory_space<vmem>>, %arg3: memref<31x128xf32, #tpu.memory_space<vmem>>, %arg4: memref<1x128xf32, #tpu.memory_space<vmem>>, %arg5: memref<1x128xf32, #tpu.memory_space<vmem>>, %arg6: memref<8x128xf32, #tpu.memory_space<vmem>>) attributes {dimension_semantics = [#tpu.dimension_semantics<parallel>], iteration_bounds = array<i64: 1>, scalar_prefetch = 0 : i64, scratch_operands = 0 : i64, tpu.core_type = #tpu.core_type<tc>, window_params = [{transform_indices = @transform_0, window_bounds = array<i64: 8, 1>}, {transform_indices = @transform_1, window_bounds = array<i64: 8, 31>}, {pipeline_mode = #tpu.pipeline_mode<synchronous>, transform_indices = @transform_2, window_bounds = array<i64: 31, 128>}, {pipeline_mode = #tpu.pipeline_mode<synchronous>, transform_indices = @transform_3, window_bounds = array<i64: 1, 128>}, {pipeline_mode = #tpu.pipeline_mode<synchronous>, transform_indices = @transform_4, window_bounds = array<i64: 1, 128>}, {transform_indices = @transform_5, window_bounds = array<i64: 8, 128>}]} {
    %c0 = arith.constant 0 : index
    %c0_0 = arith.constant 0 : index
    %0 = vector.load %arg2[%c0, %c0_0] : memref<8x31xf32, #tpu.memory_space<vmem>>, vector<8x31xf32>
    %c0_1 = arith.constant 0 : index
    %c0_2 = arith.constant 0 : index
    %1 = vector.load %arg3[%c0_1, %c0_2] : memref<31x128xf32, #tpu.memory_space<vmem>>, vector<31x128xf32>
    %cst = arith.constant dense<0.000000e+00> : vector<8x128xf32>
    %2 = tpu.matmul %0, %1, %cst {dimension_numbers = #tpu.dot_dimension_numbers<[1], [0], [0], [1], [0, 0, 1, 1], [], []>} : vector<8x31xf32>, vector<31x128xf32>, vector<8x128xf32> -> vector<8x128xf32>
    %c0_3 = arith.constant 0 : index
    %c0_4 = arith.constant 0 : index
    %3 = vector.load %arg1[%c0_3, %c0_4] : memref<8x1xf32, #tpu.memory_space<vmem>>, vector<8x1xf32>
    %c0_5 = arith.constant 0 : index
    %c0_6 = arith.constant 0 : index
    %4 = vector.load %arg4[%c0_5, %c0_6] : memref<1x128xf32, #tpu.memory_space<vmem>>, vector<1x128xf32>
    %5 = vector.broadcast %3 : vector<8x1xf32> to vector<8x128xf32>
    %6 = vector.broadcast %4 : vector<1x128xf32> to vector<8x128xf32>
    %7 = arith.mulf %5, %6 : vector<8x128xf32>
    %8 = arith.addf %2, %7 : vector<8x128xf32>
    %c0_7 = arith.constant 0 : index
    %c0_8 = arith.constant 0 : index
    %9 = vector.load %arg5[%c0_7, %c0_8] : memref<1x128xf32, #tpu.memory_space<vmem>>, vector<1x128xf32>
    %10 = vector.broadcast %9 : vector<1x128xf32> to vector<8x128xf32>
    %11 = arith.addf %8, %10 : vector<8x128xf32>
    %cst_9 = arith.constant 0.000000e+00 : f32
    %12 = vector.broadcast %cst_9 : f32 to vector<8x128xf32>
    %13 = arith.maximumf %11, %12 : vector<8x128xf32>
    %c0_10 = arith.constant 0 : index
    %c0_11 = arith.constant 0 : index
    %14 = vector.load %arg6[%c0_10, %c0_11] : memref<8x128xf32, #tpu.memory_space<vmem>>, vector<8x128xf32>
    tpu.vector_store %arg6[%c0_10, %c0_11], %13 {strides = array<i32>} : memref<8x128xf32, #tpu.memory_space<vmem>>, vector<8x128xf32>,
    return
  }
  func.func @transform_0(%arg0: i32) -> (i32, i32) {
    %c0_i32 = arith.constant 0 : i32
    %c0_i32_0 = arith.constant 0 : i32
    return %arg0, %c0_i32 : i32, i32
  }
  func.func @transform_1(%arg0: i32) -> (i32, i32) {
    %c0_i32 = arith.constant 0 : i32
    %c0_i32_0 = arith.constant 0 : i32
    return %arg0, %c0_i32 : i32, i32
  }
  func.func @transform_2(%arg0: i32) -> (i32, i32) {
    %c0_i32 = arith.constant 0 : i32
    %c0_i32_0 = arith.constant 0 : i32
    %c0_i32_1 = arith.constant 0 : i32
    return %c0_i32, %c0_i32_0 : i32, i32
  }
  func.func @transform_3(%arg0: i32) -> (i32, i32) {
    %c0_i32 = arith.constant 0 : i32
    %c0_i32_0 = arith.constant 0 : i32
    %c0_i32_1 = arith.constant 0 : i32
    return %c0_i32, %c0_i32_0 : i32, i32
  }
  func.func @transform_4(%arg0: i32) -> (i32, i32) {
    %c0_i32 = arith.constant 0 : i32
    %c0_i32_0 = arith.constant 0 : i32
    %c0_i32_1 = arith.constant 0 : i32
    return %c0_i32, %c0_i32_0 : i32, i32
  }
  func.func @transform_5(%arg0: i32) -> (i32, i32) {
    %c0_i32 = arith.constant 0 : i32
    %c0_i32_0 = arith.constant 0 : i32
    return %arg0, %c0_i32 : i32, i32
  }
}

</mosaic_0001>

<llo_original>
// kernel: tpu_custom_call.1
$region0: #{tpu_custom_call.1}
  #allocation0 [shape = 'u32[]', space=smem, size = 0x4, offset = 0x4, fixed_abs, tag = 'smem constant byte address 0x4 - core index']
  #allocation1 [shape = 'u32[72,128]{1,0:T(1,128)}', space=vmem, size = 0x9000, scoped, tag = 'internal scratch']
  %s0 = inlined_call_operand.vmem [shape: f32[8,1], index: 0, kind: input, shape index: {}]
  %s1 = inlined_call_operand.vmem [shape: f32[8,31], index: 1, kind: input, shape index: {}]
  %s2 = inlined_call_operand.hbm [shape: f32[31,128], index: 2, kind: input, shape index: {}]
  %s3 = inlined_call_operand.vmem [shape: f32[1,128], index: 3, kind: input, shape index: {}]
  %s4 = inlined_call_operand.vmem [shape: f32[1,128], index: 4, kind: input, shape index: {}]
  %s5 = inlined_call_operand.hbm [shape: f32[8,128], index: 5, kind: output, shape index: {}]
  %s6 = sld [smem:[#allocation0]]
  $region34: #{tpu_custom_call.1} parent=0
    _
  %s8 = ssub.s32 1, %s6
  %s9 = scalar_select 0, %s8, %s6
  $region1: #{tpu_custom_call.1} parent=0
    #allocation2 [shape = 'u8[16384]{0}', space=vmem, size = 0x4000, scoped, tag = 'input window, operand 2, single buffered']
    #allocation3 [shape = 's32[1]{0}', space=sflag, size = 0x4, scoped, tag = 'scoped memory for tpu_custom_call.1']
    #allocation4 [shape = 's32[1]{0}', space=sflag, size = 0x4, scoped, tag = 'scoped memory for tpu_custom_call.1']
    #allocation5 [shape = 'u8[4096]{0}', space=vmem, size = 0x1000, scoped, tag = 'output window, operand 0, single buffered']
    %10 = vsyncpa [#allocation3], 0
    %11 = vsyncpa [#allocation4], 0
    // Predicated region
    $region2: #{tpu_custom_call.1} parent=1 // pred_check
      _
    $region3: #{tpu_custom_call.1} parent=1 // pred_check_branch
      %13 = sbr.rel (0) target = $region5
    $region4: #{tpu_custom_call.1} parent=1 // pred_region
      _
    $region5: #{tpu_custom_call.1} parent=1 // pred_fallthru
      _
    // Predicated region
    $region6: #{tpu_custom_call.1} parent=1 // pred_check
      _
    $region7: #{tpu_custom_call.1} parent=1 // pred_check_branch
      %15 = sbr.rel (0) target = $region9
    $region8: #{tpu_custom_call.1} parent=1 // pred_region
      _
    $region9: #{tpu_custom_call.1} parent=1 // pred_fallthru
      _
    // Predicated region
    $region10: #{tpu_custom_call.1} parent=1 // pred_check
      _
    $region11: #{tpu_custom_call.1} parent=1 // pred_check_branch
      %17 = sbr.rel (0) target = $region13
    $region12: #{tpu_custom_call.1} parent=1 // pred_region
      %19 = vsyncadd [#allocation3], 0
      %s20 = sshll.u32 %s2, 4
      %s21 = int_to_ptr.hbm [resolvable:$true] %s20
      %s22 = sshll.u32 [#allocation2], 4
      %s23 = int_to_ptr.vmem [resolvable:$true] %s22
      %28 = dma.hbm_to_vmem [thread:$0]  %s21, 512, %s23, [#allocation3], 128, 128, 8
    $region13: #{tpu_custom_call.1} parent=1 // pred_fallthru
      _
    // Predicated region
    $region14: #{tpu_custom_call.1} parent=1 // pred_check
      _
    $region15: #{tpu_custom_call.1} parent=1 // pred_check_branch
      %30 = sbr.rel (0) target = $region17
    $region16: #{tpu_custom_call.1} parent=1 // pred_region
      _
    $region17: #{tpu_custom_call.1} parent=1 // pred_fallthru
      _
    // Predicated region
    $region18: #{tpu_custom_call.1} parent=1 // pred_check
      _
    $region19: #{tpu_custom_call.1} parent=1 // pred_check_branch
      %32 = sbr.rel (0) target = $region21
    $region20: #{tpu_custom_call.1} parent=1 // pred_region
      _
    $region21: #{tpu_custom_call.1} parent=1 // pred_fallthru
      _
    // Predicated region
    $region22: #{tpu_custom_call.1} parent=1 // pred_check
      _
    $region23: #{tpu_custom_call.1} parent=1 // pred_check_branch
      %34 = sbr.rel (0) target = $region25
    $region24: #{tpu_custom_call.1} parent=1 // pred_region
      %36 = dma.done [#allocation3], 512
    $region25: #{tpu_custom_call.1} parent=1 // pred_fallthru
      _
    %v37 = vld [vmem:[%s1] sm:$0xff]
    %v38 = vld [vmem:[#allocation2] sm:$0xff]
    %v39 = vld [vmem:[#allocation2 + $0x8] sm:$0xff]
    %v40 = vld [vmem:[#allocation2 + $0x10] sm:$0xff]
    %v41 = vld [vmem:[#allocation2 + $0x18] sm:$0x7f]
    %v42 = vld [vmem:[%s0] sm:$0xff]
    %v43 = vld [vmem:[%s3] sm:$0x1]
    %45 = vset.pattern.permute.xlu0 0
    %46 = vperm.xlu0 %45, %v42
    %v47 = vpop.permute.xlu0 %46
    %v50 = vperm.slane %v43, 0
    %v52 = vmul.f32 %v47, %v50
    %vm53 = vcmask 252928
    %v55 = vsel %vm53, %v37, 0
    %vm57 = vcmask 1046528
    %v59 = vsel %vm57, %v41, 0
    %61 = vmatpush.msra.mxu0 0.0
    %62 = vmatpush.msra.mxu0 0.0
    %63 = vmatpush.msra.mxu0 0.0
    %64 = vmatpush.msra.mxu0 0.0
    %65 = vmatpush.msra.mxu0 0.0
    %66 = vmatpush.msra.mxu0 0.0
    %67 = vmatpush.msra.mxu0 0.0
    %68 = vmatpush.msra.mxu0 0.0
    %69 = vmatpush.msra.mxu0 0.0
    %70 = vmatpush.msra.mxu0 0.0
    %71 = vmatpush.msra.mxu0 0.0
    %72 = vmatpush.msra.mxu0 0.0
    %73 = vmatpush.msra.mxu0 %v59
    %74 = vmatpush.msra.mxu0 %v40
    %75 = vmatpush.msra.mxu0 %v39
    %76 = vmatpush.msra.mxu0 %v38
    %77 = vmatmul.f32.gmra.mxu0 %v55
    %v78 = vpop.f32.mrf.mxu0
    %v79 = vadd.f32 %v52, %v78
    %80 = vdwg.mxu0
    %v81 = vld [vmem:[%s4] sm:$0x1]
    %v83 = vperm.slane %v81, 0
    %v85 = vadd.f32 %v79, %v83
    %v86 = vmax.f32 %v85, 0.0
    %87 = vst [vmem:[#allocation5] sm:$0xff] %v86
    // Predicated region
    $region26: #{tpu_custom_call.1} parent=1 // pred_check
      _
    $region27: #{tpu_custom_call.1} parent=1 // pred_check_branch
      %89 = sbr.rel (0) target = $region29
    $region28: #{tpu_custom_call.1} parent=1 // pred_region
      %91 = vsyncadd [#allocation4], 0
      %s93 = sshll.u32 [#allocation5], 4
      %s94 = int_to_ptr.vmem [resolvable:$true] %s93
      %s95 = sshll.u32 %s5, 4
      %s96 = int_to_ptr.hbm [resolvable:$true] %s95
      %98 = dma.vmem_to_hbm [thread:$0]  %s94, 128, %s96, [#allocation4]
    $region29: #{tpu_custom_call.1} parent=1 // pred_fallthru
      _
    // Predicated region
    $region30: #{tpu_custom_call.1} parent=1 // pred_check
      _
    $region31: #{tpu_custom_call.1} parent=1 // pred_check_branch
      %100 = sbr.rel (0) target = $region33
    $region32: #{tpu_custom_call.1} parent=1 // pred_region
      %102 = dma.done [#allocation4], 128
    $region33: #{tpu_custom_call.1} parent=1 // pred_fallthru
      _
    %103 = vsyncpa [#allocation3], 1
    %104 = vsyncpa [#allocation4], 1

</llo_original>
